<compile_context>
chip_gen: v6e
topology: v6e:2x2x1
jax: 0.10.0
libtpu: 0.0.40
codegen_flags: <defaults>
</compile_context>

<pallas_src>
import jax
import jax.numpy as jnp
from jax.experimental import pallas as pl
from jax.experimental.pallas import tpu as pltpu


def aluminium_kernel(lai_ref, mask_ref, ts_ref, wmb_ref, out_ref):
    """One batch-block per grid step; direct slice stores (no concat temp).

    lai_ref  : (Bt, 2, HW)     VMEM block  -- input LAI (t-2, t-1)
    mask_ref : (Bt, 2, 6, HW)  VMEM block  -- input LAI masks (t-2, t-1)
    ts_ref   : (Bp, EE, 1)     VMEM, fetched once -- tiled timestamp embedding
    wmb_ref  : (M, 7)          SMEM -- packed 1x1-conv [weight | bias]
    out_ref  : (Bt, C, HW)     VMEM block -- concat(lai, mask_t1, mask_t2, ts)
    """
    Bt = lai_ref.shape[0]
    HW = lai_ref.shape[2]
    M = wmb_ref.shape[0]
    C_IN = mask_ref.shape[2]          # 6 mask channels
    EE = ts_ref.shape[1]              # E*E timestamp channels
    TS0 = 2 + 2 * M

    # --- channels [0, 2): LAI pass-through (single grouped store) -----------
    out_ref[:, 0:2, :] = lai_ref[...]

    # --- channels [2, 2+2M): 1x1 conv as VPU broadcast-MACs -----------------
    # Output order: mask_t1 (time index 1) first, then mask_t2 (time index 0),
    # matching the PyTorch forward.  Each channel is stored as soon as it is
    # computed, so the live set stays at ~7 (Bt, HW) slabs and no concat copy
    # is ever materialized.  The 6 input slabs per time step are loaded once
    # and reused across the M output channels.
    for t_out, t_in in ((0, 1), (1, 0)):
        xs = [mask_ref[:, t_in, c, :] for c in range(C_IN)]       # (Bt, HW) x6
        for m in range(M):
            acc = xs[0] * wmb_ref[m, 0]
            for c in range(1, C_IN):
                acc = acc + xs[c] * wmb_ref[m, c]
            acc = acc + wmb_ref[m, C_IN]                          # bias
            out_ref[:, 2 + t_out * M + m, :] = acc

    # --- channels [2+2M, C): timestamp map -----------------------------------
    # ts_ref uses a constant index_map, so it is copied to VMEM once (not a
    # padded micro-DMA every step).  Slice this block's rows and lane-broadcast
    # straight into the store; no (Bt, EE, HW) temporary is materialized.
    row0 = pl.program_id(0) * Bt
    ts_blk = ts_ref[pl.ds(row0, Bt), :, :]                        # (Bt, EE, 1)
    out_ref[:, TS0:TS0 + EE, :] = jnp.broadcast_to(ts_blk, (Bt, EE, HW))


def _vmem_capacity_bytes():
    """Physical per-core VMEM, with a conservative fallback (v7x = 64 MiB)."""
    try:
        cap = getattr(pltpu.get_tpu_info(), "vmem_capacity_bytes", None)
        if cap:
            return int(cap)
    except Exception:
        pass
    return 64 << 20


_MIN_STEP_BYTES = 2 << 20      # amortize the ~0.35 us/grid-step overhead


def _pad8(n):
    return -(-n // 8) * 8


def _choose_block_batch(B, HW, C, vmem_budget_bytes):
    """Size the batch block from bytes, not a fixed divisor target.

    Double-buffered (sublane-padded, f32) input+output blocks plus ~8 (Bt, HW)
    in-kernel temporaries must fit the VMEM budget; per-step HBM traffic should
    be a few MiB so the fixed per-step pipeline cost is amortized.
    """
    per_b_blocks = (_pad8(2) + 2 * _pad8(6) + _pad8(C)) * HW * 4  # lai+mask+out
    per_b = 2 * per_b_blocks + 8 * HW * 4                         # 2x buf + temps
    bt = max(1, min(B, vmem_budget_bytes // per_b))
    if bt >= B and B > 1:
        # Whole batch fits in one step: split in two (keeps both v7x
        # TensorCores busy) only if each step still moves a few MiB; on
        # single-TC chips tiny workloads are better off as a single step.
        traffic_per_b = (2 + 12 + C) * HW * 4
        if (B * traffic_per_b) // 2 >= _MIN_STEP_BYTES:
            bt = -(-B // 2)
    return int(bt)


def aluminium_forward(s1_data, in_lai, in_mask_lai, glob, params, *,
                      block_batch=None):
    """Wrapper: reshapes + tiny MLP in plain JAX + pallas_call.

    Returns (concat_all, None) -- see TODO on the missing AutoEncoder.
    """
    del s1_data  # unused by Aluminium.forward (matches PyTorch semantics)
    wm, bm, w1, b1, w2t, b2c = params
    B = in_lai.shape[0]
    H, W = in_lai.shape[-2], in_lai.shape[-1]
    HW = H * W
    M = wm.shape[0]
    C_IN = wm.shape[1]
    E = w2t.shape[0]
    EE = E * E
    C = 2 + 2 * M + EE

    # Module is f32 end-to-end; the casts are no-ops for f32 inputs.
    lai_flat = in_lai.reshape(B, 2, HW).astype(jnp.float32)
    mask_flat = in_mask_lai.reshape(B, 2, C_IN, HW).astype(jnp.float32)

    # Tiny MLP on the global features: (B,2)x(2,L0)x(L0,E) -- plain XLA.
    h = jnp.maximum(glob.astype(jnp.float32) @ w1 + b1, 0.0)       # (B, L0)
    emb = h @ w2t.T + b2c.reshape(1, -1)                           # (B, E)
    ts_col = jnp.tile(emb, (1, E))[:, :, None]                     # (B, E*E, 1)

    # Pack the 1x1-conv weight and bias into one small SMEM table.
    wmb = jnp.concatenate([wm, bm], axis=1).astype(jnp.float32)    # (M, 7)

    cap = _vmem_capacity_bytes()
    # Budget for the pipelined blocks; leave room for the resident ts column
    # and compiler scratch.
    budget = int(cap * 0.6) - B * 16 * 128 * 4
    if block_batch is not None:
        Bt = max(1, int(block_batch))
    else:
        Bt = _choose_block_batch(B, HW, C, max(budget, 4 << 20))

    # Non-divisible batch: pad up to a multiple of Bt, slice the result.
    Bp = -(-B // Bt) * Bt
    if Bp != B:
        pad = ((0, Bp - B),)
        lai_flat = jnp.pad(lai_flat, pad + ((0, 0),) * 2)
        mask_flat = jnp.pad(mask_flat, pad + ((0, 0),) * 3)
        ts_col = jnp.pad(ts_col, pad + ((0, 0),) * 2)
    grid = (Bp // Bt,)

    out_flat = pl.pallas_call(
        aluminium_kernel,
        out_shape=jax.ShapeDtypeStruct((Bp, C, HW), jnp.float32),
        grid_spec=pltpu.PrefetchScalarGridSpec(
            num_scalar_prefetch=0,
            grid=grid,
            in_specs=[
                pl.BlockSpec((Bt, 2, HW), lambda b: (b, 0, 0)),
                pl.BlockSpec((Bt, 2, C_IN, HW), lambda b: (b, 0, 0, 0)),
                # Constant block index -> the tiny embedding column is DMA'd
                # into VMEM once and reused by every grid step.
                pl.BlockSpec((Bp, EE, 1), lambda b: (0, 0, 0)),
                pl.BlockSpec(memory_space=pltpu.MemorySpace.SMEM),
            ],
            out_specs=pl.BlockSpec((Bt, C, HW), lambda b: (b, 0, 0)),
        ),
        compiler_params=pltpu.CompilerParams(
            dimension_semantics=("parallel",),
            vmem_limit_bytes=int(cap * 0.85),
        ),
    )(lai_flat, mask_flat, ts_col, wmb)

    concat_all = out_flat[:B].reshape(B, C, H, W)
    # TODO(synk): self.autoencoder(concat_all) not implemented (class not provided).
    return concat_all, None


def reference_forward(in_lai, in_mask_lai, glob, params):
    """Pure-JAX reference mirroring the PyTorch forward (up to concat_all)."""
    wm, bm, w1, b1, w2t, b2c = params
    B = in_lai.shape[0]
    H, W = in_lai.shape[-2], in_lai.shape[-1]
    E = w2t.shape[0]

    def conv1x1(x):  # x: (B, 6, H, W)
        return jnp.einsum("mc,bchw->bmhw", wm, x) + bm.reshape(1, -1, 1, 1)

    mask_t2 = conv1x1(in_mask_lai[:, 0])
    mask_t1 = conv1x1(in_mask_lai[:, 1])
    new_lai = in_lai.reshape(B, -1, H, W)

    h = jnp.maximum(glob @ w1 + b1, 0.0)           # (B, L0)
    emb = h @ w2t.T + b2c.reshape(1, -1)           # (B, E)
    tiled = jnp.tile(emb, (1, E))                  # (B, E*E)
    ts_map = jnp.broadcast_to(tiled[:, :, None, None], (B, E * E, H, W))

    return jnp.concatenate([new_lai, mask_t1, mask_t2, ts_map], axis=1)


def _run_case(key, B, H, W, M, L0, E, block_batch=None):
    ks = jax.random.split(key, 10)
    wm = jax.random.normal(ks[0], (M, 6), jnp.float32) * 0.1      # Conv2d(6, M, 1) weight
    bm = jax.random.normal(ks[1], (M, 1), jnp.float32) * 0.1      # Conv2d bias (column)
    w1 = jax.random.normal(ks[2], (2, L0), jnp.float32) * 0.1     # Linear(2, L0) weight^T
    b1 = jax.random.normal(ks[3], (1, L0), jnp.float32) * 0.1
    w2t = jax.random.normal(ks[4], (E, L0), jnp.float32) * 0.1    # Linear(L0, E) weight
    b2c = jax.random.normal(ks[5], (E, 1), jnp.float32) * 0.1
    params = (wm, bm, w1, b1, w2t, b2c)

    s1_data = jax.random.normal(ks[6], (B, 3, 2, H, W), jnp.float32)     # unused
    in_lai = jax.random.normal(ks[7], (B, 2, 1, H, W), jnp.float32)
    in_mask_lai = jax.random.normal(ks[8], (B, 2, 6, H, W), jnp.float32)
    glob = jax.random.normal(ks[9], (B, 2), jnp.float32)

    out, _ = aluminium_forward(s1_data, in_lai, in_mask_lai, glob, params,
                               block_batch=block_batch)
    out = jax.block_until_ready(out)

    ref = reference_forward(in_lai, in_mask_lai, glob, params)
    assert out.shape == (B, 2 + 2 * M + E * E, H, W), out.shape
    assert jnp.allclose(out, ref, atol=1e-5, rtol=1e-5), "mismatch vs JAX reference"


if __name__ == "__main__":
    # Small, module-consistent shapes.
    M = 4            # mask_embedding_channels
    L0, E = 8, 4     # mlp_layers = [8, 4]

    key = jax.random.PRNGKey(0)
    k1, k2, k3 = jax.random.split(key, 3)

    # B=2: single-step path (byte-based sizing keeps tiny workloads at 1 step).
    _run_case(k1, B=2, H=16, W=16, M=M, L0=L0, E=E)
    # B=8: batched single-block path.
    _run_case(k2, B=8, H=16, W=16, M=M, L0=L0, E=E)
    # B=3 with a forced block size of 2: exercises batch padding + multi-step grid.
    _run_case(k3, B=3, H=16, W=16, M=M, L0=L0, E=E, block_batch=2)

    print("KERNEL_OK")
</pallas_src>

<mosaic_0001>
module attributes {stable_mosaic.version = 11 : i64} {
  func.func @aluminium_kernel(%arg0: i32, %arg1: memref<2x2x256xf32, #tpu.memory_space<vmem>>, %arg2: memref<2x2x6x256xf32, #tpu.memory_space<vmem>>, %arg3: memref<2x16x1xf32, #tpu.memory_space<vmem>>, %arg4: memref<4x7xf32, #tpu.memory_space<smem>>, %arg5: memref<2x26x256xf32, #tpu.memory_space<vmem>>) attributes {dimension_semantics = [#tpu.dimension_semantics<parallel>], iteration_bounds = array<i64: 1>, scalar_prefetch = 0 : i64, scratch_operands = 0 : i64, tpu.core_type = #tpu.core_type<tc>, window_params = [{transform_indices = @transform_0, window_bounds = array<i64: 2, 2, 256>}, {transform_indices = @transform_1, window_bounds = array<i64: 2, 2, 6, 256>}, {pipeline_mode = #tpu.pipeline_mode<synchronous>, transform_indices = @transform_2, window_bounds = array<i64: 2, 16, 1>}, {transform_indices = @transform_3, window_bounds = array<i64: 4, 7>}, {transform_indices = @transform_4, window_bounds = array<i64: 2, 26, 256>}]} {
    %c0 = arith.constant 0 : index
    %c0_0 = arith.constant 0 : index
    %c0_1 = arith.constant 0 : index
    %0 = vector.load %arg1[%c0, %c0_0, %c0_1] : memref<2x2x256xf32, #tpu.memory_space<vmem>>, vector<2x2x256xf32>
    %c0_2 = arith.constant 0 : index
    %c0_3 = arith.constant 0 : index
    %c0_4 = arith.constant 0 : index
    %1 = vector.load %arg5[%c0_2, %c0_3, %c0_4] : memref<2x26x256xf32, #tpu.memory_space<vmem>>, vector<2x2x256xf32>
    tpu.vector_store %arg5[%c0_2, %c0_3, %c0_4], %0 {strides = array<i32>} : memref<2x26x256xf32, #tpu.memory_space<vmem>>, vector<2x2x256xf32>,
    %c0_5 = arith.constant 0 : index
    %c1 = arith.constant 1 : index
    %c0_6 = arith.constant 0 : index
    %c0_7 = arith.constant 0 : index
    %2 = vector.load %arg2[%c0_5, %c1, %c0_6, %c0_7] : memref<2x2x6x256xf32, #tpu.memory_space<vmem>>, vector<2x1x1x256xf32>
    %3 = vector.shape_cast %2 : vector<2x1x1x256xf32> to vector<2x256xf32>
    %c0_8 = arith.constant 0 : index
    %c1_9 = arith.constant 1 : index
    %c1_10 = arith.constant 1 : index
    %c0_11 = arith.constant 0 : index
    %4 = vector.load %arg2[%c0_8, %c1_9, %c1_10, %c0_11] : memref<2x2x6x256xf32, #tpu.memory_space<vmem>>, vector<2x1x1x256xf32>
    %5 = vector.shape_cast %4 : vector<2x1x1x256xf32> to vector<2x256xf32>
    %c0_12 = arith.constant 0 : index
    %c1_13 = arith.constant 1 : index
    %c2 = arith.constant 2 : index
    %c0_14 = arith.constant 0 : index
    %6 = vector.load %arg2[%c0_12, %c1_13, %c2, %c0_14] : memref<2x2x6x256xf32, #tpu.memory_space<vmem>>, vector<2x1x1x256xf32>
    %7 = vector.shape_cast %6 : vector<2x1x1x256xf32> to vector<2x256xf32>
    %c0_15 = arith.constant 0 : index
    %c1_16 = arith.constant 1 : index
    %c3 = arith.constant 3 : index
    %c0_17 = arith.constant 0 : index
    %8 = vector.load %arg2[%c0_15, %c1_16, %c3, %c0_17] : memref<2x2x6x256xf32, #tpu.memory_space<vmem>>, vector<2x1x1x256xf32>
    %9 = vector.shape_cast %8 : vector<2x1x1x256xf32> to vector<2x256xf32>
    %c0_18 = arith.constant 0 : index
    %c1_19 = arith.constant 1 : index
    %c4 = arith.constant 4 : index
    %c0_20 = arith.constant 0 : index
    %10 = vector.load %arg2[%c0_18, %c1_19, %c4, %c0_20] : memref<2x2x6x256xf32, #tpu.memory_space<vmem>>, vector<2x1x1x256xf32>
    %11 = vector.shape_cast %10 : vector<2x1x1x256xf32> to vector<2x256xf32>
    %c0_21 = arith.constant 0 : index
    %c1_22 = arith.constant 1 : index
    %c5 = arith.constant 5 : index
    %c0_23 = arith.constant 0 : index
    %12 = vector.load %arg2[%c0_21, %c1_22, %c5, %c0_23] : memref<2x2x6x256xf32, #tpu.memory_space<vmem>>, vector<2x1x1x256xf32>
    %13 = vector.shape_cast %12 : vector<2x1x1x256xf32> to vector<2x256xf32>
    %c0_24 = arith.constant 0 : index
    %c0_25 = arith.constant 0 : index
    %14 = memref.load %arg4[%c0_24, %c0_25] : memref<4x7xf32, #tpu.memory_space<smem>>
    %15 = vector.broadcast %14 : f32 to vector<2x256xf32>
    %16 = arith.mulf %3, %15 : vector<2x256xf32>
    %c0_26 = arith.constant 0 : index
    %c1_27 = arith.constant 1 : index
    %17 = memref.load %arg4[%c0_26, %c1_27] : memref<4x7xf32, #tpu.memory_space<smem>>
    %18 = vector.broadcast %17 : f32 to vector<2x256xf32>
    %19 = arith.mulf %5, %18 : vector<2x256xf32>
    %20 = arith.addf %16, %19 : vector<2x256xf32>
    %c0_28 = arith.constant 0 : index
    %c2_29 = arith.constant 2 : index
    %21 = memref.load %arg4[%c0_28, %c2_29] : memref<4x7xf32, #tpu.memory_space<smem>>
    %22 = vector.broadcast %21 : f32 to vector<2x256xf32>
    %23 = arith.mulf %7, %22 : vector<2x256xf32>
    %24 = arith.addf %20, %23 : vector<2x256xf32>
    %c0_30 = arith.constant 0 : index
    %c3_31 = arith.constant 3 : index
    %25 = memref.load %arg4[%c0_30, %c3_31] : memref<4x7xf32, #tpu.memory_space<smem>>
    %26 = vector.broadcast %25 : f32 to vector<2x256xf32>
    %27 = arith.mulf %9, %26 : vector<2x256xf32>
    %28 = arith.addf %24, %27 : vector<2x256xf32>
    %c0_32 = arith.constant 0 : index
    %c4_33 = arith.constant 4 : index
    %29 = memref.load %arg4[%c0_32, %c4_33] : memref<4x7xf32, #tpu.memory_space<smem>>
    %30 = vector.broadcast %29 : f32 to vector<2x256xf32>
    %31 = arith.mulf %11, %30 : vector<2x256xf32>
    %32 = arith.addf %28, %31 : vector<2x256xf32>
    %c0_34 = arith.constant 0 : index
    %c5_35 = arith.constant 5 : index
    %33 = memref.load %arg4[%c0_34, %c5_35] : memref<4x7xf32, #tpu.memory_space<smem>>
    %34 = vector.broadcast %33 : f32 to vector<2x256xf32>
    %35 = arith.mulf %13, %34 : vector<2x256xf32>
    %36 = arith.addf %32, %35 : vector<2x256xf32>
    %c0_36 = arith.constant 0 : index
    %c6 = arith.constant 6 : index
    %37 = memref.load %arg4[%c0_36, %c6] : memref<4x7xf32, #tpu.memory_space<smem>>
    %38 = vector.broadcast %37 : f32 to vector<2x256xf32>
    %39 = arith.addf %36, %38 : vector<2x256xf32>
    %c0_37 = arith.constant 0 : index
    %c2_38 = arith.constant 2 : index
    %c0_39 = arith.constant 0 : index
    %40 = vector.load %arg5[%c0_37, %c2_38, %c0_39] : memref<2x26x256xf32, #tpu.memory_space<vmem>>, vector<2x1x256xf32>
    %41 = vector.shape_cast %40 : vector<2x1x256xf32> to vector<2x256xf32>
    %42 = vector.shape_cast %39 : vector<2x256xf32> to vector<2x1x256xf32>
    tpu.vector_store %arg5[%c0_37, %c2_38, %c0_39], %42 {strides = array<i32>} : memref<2x26x256xf32, #tpu.memory_space<vmem>>, vector<2x1x256xf32>,
    %c1_40 = arith.constant 1 : index
    %c0_41 = arith.constant 0 : index
    %43 = memref.load %arg4[%c1_40, %c0_41] : memref<4x7xf32, #tpu.memory_space<smem>>
    %44 = vector.broadcast %43 : f32 to vector<2x256xf32>
    %45 = arith.mulf %3, %44 : vector<2x256xf32>
    %c1_42 = arith.constant 1 : index
    %c1_43 = arith.constant 1 : index
    %46 = memref.load %arg4[%c1_42, %c1_43] : memref<4x7xf32, #tpu.memory_space<smem>>
    %47 = vector.broadcast %46 : f32 to vector<2x256xf32>
    %48 = arith.mulf %5, %47 : vector<2x256xf32>
    %49 = arith.addf %45, %48 : vector<2x256xf32>
    %c1_44 = arith.constant 1 : index
    %c2_45 = arith.constant 2 : index
    %50 = memref.load %arg4[%c1_44, %c2_45] : memref<4x7xf32, #tpu.memory_space<smem>>
    %51 = vector.broadcast %50 : f32 to vector<2x256xf32>
    %52 = arith.mulf %7, %51 : vector<2x256xf32>
    %53 = arith.addf %49, %52 : vector<2x256xf32>
    %c1_46 = arith.constant 1 : index
    %c3_47 = arith.constant 3 : index
    %54 = memref.load %arg4[%c1_46, %c3_47] : memref<4x7xf32, #tpu.memory_space<smem>>
    %55 = vector.broadcast %54 : f32 to vector<2x256xf32>
    %56 = arith.mulf %9, %55 : vector<2x256xf32>
    %57 = arith.addf %53, %56 : vector<2x256xf32>
    %c1_48 = arith.constant 1 : index
    %c4_49 = arith.constant 4 : index
    %58 = memref.load %arg4[%c1_48, %c4_49] : memref<4x7xf32, #tpu.memory_space<smem>>
    %59 = vector.broadcast %58 : f32 to vector<2x256xf32>
    %60 = arith.mulf %11, %59 : vector<2x256xf32>
    %61 = arith.addf %57, %60 : vector<2x256xf32>
    %c1_50 = arith.constant 1 : index
    %c5_51 = arith.constant 5 : index
    %62 = memref.load %arg4[%c1_50, %c5_51] : memref<4x7xf32, #tpu.memory_space<smem>>
    %63 = vector.broadcast %62 : f32 to vector<2x256xf32>
    %64 = arith.mulf %13, %63 : vector<2x256xf32>
    %65 = arith.addf %61, %64 : vector<2x256xf32>
    %c1_52 = arith.constant 1 : index
    %c6_53 = arith.constant 6 : index
    %66 = memref.load %arg4[%c1_52, %c6_53] : memref<4x7xf32, #tpu.memory_space<smem>>
    %67 = vector.broadcast %66 : f32 to vector<2x256xf32>
    %68 = arith.addf %65, %67 : vector<2x256xf32>
    %c0_54 = arith.constant 0 : index
    %c3_55 = arith.constant 3 : index
    %c0_56 = arith.constant 0 : index
    %69 = vector.load %arg5[%c0_54, %c3_55, %c0_56] : memref<2x26x256xf32, #tpu.memory_space<vmem>>, vector<2x1x256xf32>
    %70 = vector.shape_cast %69 : vector<2x1x256xf32> to vector<2x256xf32>
    %71 = vector.shape_cast %68 : vector<2x256xf32> to vector<2x1x256xf32>
    tpu.vector_store %arg5[%c0_54, %c3_55, %c0_56], %71 {strides = array<i32>} : memref<2x26x256xf32, #tpu.memory_space<vmem>>, vector<2x1x256xf32>,
    %c2_57 = arith.constant 2 : index
    %c0_58 = arith.constant 0 : index
    %72 = memref.load %arg4[%c2_57, %c0_58] : memref<4x7xf32, #tpu.memory_space<smem>>
    %73 = vector.broadcast %72 : f32 to vector<2x256xf32>
    %74 = arith.mulf %3, %73 : vector<2x256xf32>
    %c2_59 = arith.constant 2 : index
    %c1_60 = arith.constant 1 : index
    %75 = memref.load %arg4[%c2_59, %c1_60] : memref<4x7xf32, #tpu.memory_space<smem>>
    %76 = vector.broadcast %75 : f32 to vector<2x256xf32>
    %77 = arith.mulf %5, %76 : vector<2x256xf32>
    %78 = arith.addf %74, %77 : vector<2x256xf32>
    %c2_61 = arith.constant 2 : index
    %c2_62 = arith.constant 2 : index
    %79 = memref.load %arg4[%c2_61, %c2_62] : memref<4x7xf32, #tpu.memory_space<smem>>
    %80 = vector.broadcast %79 : f32 to vector<2x256xf32>
    %81 = arith.mulf %7, %80 : vector<2x256xf32>
    %82 = arith.addf %78, %81 : vector<2x256xf32>
    %c2_63 = arith.constant 2 : index
    %c3_64 = arith.constant 3 : index
    %83 = memref.load %arg4[%c2_63, %c3_64] : memref<4x7xf32, #tpu.memory_space<smem>>
    %84 = vector.broadcast %83 : f32 to vector<2x256xf32>
    %85 = arith.mulf %9, %84 : vector<2x256xf32>
    %86 = arith.addf %82, %85 : vector<2x256xf32>
    %c2_65 = arith.constant 2 : index
    %c4_66 = arith.constant 4 : index
    %87 = memref.load %arg4[%c2_65, %c4_66] : memref<4x7xf32, #tpu.memory_space<smem>>
    %88 = vector.broadcast %87 : f32 to vector<2x256xf32>
    %89 = arith.mulf %11, %88 : vector<2x256xf32>
    %90 = arith.addf %86, %89 : vector<2x256xf32>
    %c2_67 = arith.constant 2 : index
    %c5_68 = arith.constant 5 : index
    %91 = memref.load %arg4[%c2_67, %c5_68] : memref<4x7xf32, #tpu.memory_space<smem>>
    %92 = vector.broadcast %91 : f32 to vector<2x256xf32>
    %93 = arith.mulf %13, %92 : vector<2x256xf32>
    %94 = arith.addf %90, %93 : vector<2x256xf32>
    %c2_69 = arith.constant 2 : index
    %c6_70 = arith.constant 6 : index
    %95 = memref.load %arg4[%c2_69, %c6_70] : memref<4x7xf32, #tpu.memory_space<smem>>
    %96 = vector.broadcast %95 : f32 to vector<2x256xf32>
    %97 = arith.addf %94, %96 : vector<2x256xf32>
    %c0_71 = arith.constant 0 : index
    %c4_72 = arith.constant 4 : index
    %c0_73 = arith.constant 0 : index
    %98 = vector.load %arg5[%c0_71, %c4_72, %c0_73] : memref<2x26x256xf32, #tpu.memory_space<vmem>>, vector<2x1x256xf32>
    %99 = vector.shape_cast %98 : vector<2x1x256xf32> to vector<2x256xf32>
    %100 = vector.shape_cast %97 : vector<2x256xf32> to vector<2x1x256xf32>
    tpu.vector_store %arg5[%c0_71, %c4_72, %c0_73], %100 {strides = array<i32>} : memref<2x26x256xf32, #tpu.memory_space<vmem>>, vector<2x1x256xf32>,
    %c3_74 = arith.constant 3 : index
    %c0_75 = arith.constant 0 : index
    %101 = memref.load %arg4[%c3_74, %c0_75] : memref<4x7xf32, #tpu.memory_space<smem>>
    %102 = vector.broadcast %101 : f32 to vector<2x256xf32>
    %103 = arith.mulf %3, %102 : vector<2x256xf32>
    %c3_76 = arith.constant 3 : index
    %c1_77 = arith.constant 1 : index
    %104 = memref.load %arg4[%c3_76, %c1_77] : memref<4x7xf32, #tpu.memory_space<smem>>
    %105 = vector.broadcast %104 : f32 to vector<2x256xf32>
    %106 = arith.mulf %5, %105 : vector<2x256xf32>
    %107 = arith.addf %103, %106 : vector<2x256xf32>
    %c3_78 = arith.constant 3 : index
    %c2_79 = arith.constant 2 : index
    %108 = memref.load %arg4[%c3_78, %c2_79] : memref<4x7xf32, #tpu.memory_space<smem>>
    %109 = vector.broadcast %108 : f32 to vector<2x256xf32>
    %110 = arith.mulf %7, %109 : vector<2x256xf32>
    %111 = arith.addf %107, %110 : vector<2x256xf32>
    %c3_80 = arith.constant 3 : index
    %c3_81 = arith.constant 3 : index
    %112 = memref.load %arg4[%c3_80, %c3_81] : memref<4x7xf32, #tpu.memory_space<smem>>
    %113 = vector.broadcast %112 : f32 to vector<2x256xf32>
    %114 = arith.mulf %9, %113 : vector<2x256xf32>
    %115 = arith.addf %111, %114 : vector<2x256xf32>
    %c3_82 = arith.constant 3 : index
    %c4_83 = arith.constant 4 : index
    %116 = memref.load %arg4[%c3_82, %c4_83] : memref<4x7xf32, #tpu.memory_space<smem>>
    %117 = vector.broadcast %116 : f32 to vector<2x256xf32>
    %118 = arith.mulf %11, %117 : vector<2x256xf32>
    %119 = arith.addf %115, %118 : vector<2x256xf32>
    %c3_84 = arith.constant 3 : index
    %c5_85 = arith.constant 5 : index
    %120 = memref.load %arg4[%c3_84, %c5_85] : memref<4x7xf32, #tpu.memory_space<smem>>
    %121 = vector.broadcast %120 : f32 to vector<2x256xf32>
    %122 = arith.mulf %13, %121 : vector<2x256xf32>
    %123 = arith.addf %119, %122 : vector<2x256xf32>
    %c3_86 = arith.constant 3 : index
    %c6_87 = arith.constant 6 : index
    %124 = memref.load %arg4[%c3_86, %c6_87] : memref<4x7xf32, #tpu.memory_space<smem>>
    %125 = vector.broadcast %124 : f32 to vector<2x256xf32>
    %126 = arith.addf %123, %125 : vector<2x256xf32>
    %c0_88 = arith.constant 0 : index
    %c5_89 = arith.constant 5 : index
    %c0_90 = arith.constant 0 : index
    %127 = vector.load %arg5[%c0_88, %c5_89, %c0_90] : memref<2x26x256xf32, #tpu.memory_space<vmem>>, vector<2x1x256xf32>
    %128 = vector.shape_cast %127 : vector<2x1x256xf32> to vector<2x256xf32>
    %129 = vector.shape_cast %126 : vector<2x256xf32> to vector<2x1x256xf32>
    tpu.vector_store %arg5[%c0_88, %c5_89, %c0_90], %129 {strides = array<i32>} : memref<2x26x256xf32, #tpu.memory_space<vmem>>, vector<2x1x256xf32>,
    %c0_91 = arith.constant 0 : index
    %c0_92 = arith.constant 0 : index
    %c0_93 = arith.constant 0 : index
    %c0_94 = arith.constant 0 : index
    %130 = vector.load %arg2[%c0_91, %c0_92, %c0_93, %c0_94] : memref<2x2x6x256xf32, #tpu.memory_space<vmem>>, vector<2x1x1x256xf32>
    %131 = vector.shape_cast %130 : vector<2x1x1x256xf32> to vector<2x256xf32>
    %c0_95 = arith.constant 0 : index
    %c0_96 = arith.constant 0 : index
    %c1_97 = arith.constant 1 : index
    %c0_98 = arith.constant 0 : index
    %132 = vector.load %arg2[%c0_95, %c0_96, %c1_97, %c0_98] : memref<2x2x6x256xf32, #tpu.memory_space<vmem>>, vector<2x1x1x256xf32>
    %133 = vector.shape_cast %132 : vector<2x1x1x256xf32> to vector<2x256xf32>
    %c0_99 = arith.constant 0 : index
    %c0_100 = arith.constant 0 : index
    %c2_101 = arith.constant 2 : index
    %c0_102 = arith.constant 0 : index
    %134 = vector.load %arg2[%c0_99, %c0_100, %c2_101, %c0_102] : memref<2x2x6x256xf32, #tpu.memory_space<vmem>>, vector<2x1x1x256xf32>
    %135 = vector.shape_cast %134 : vector<2x1x1x256xf32> to vector<2x256xf32>
    %c0_103 = arith.constant 0 : index
    %c0_104 = arith.constant 0 : index
    %c3_105 = arith.constant 3 : index
    %c0_106 = arith.constant 0 : index
    %136 = vector.load %arg2[%c0_103, %c0_104, %c3_105, %c0_106] : memref<2x2x6x256xf32, #tpu.memory_space<vmem>>, vector<2x1x1x256xf32>
    %137 = vector.shape_cast %136 : vector<2x1x1x256xf32> to vector<2x256xf32>
    %c0_107 = arith.constant 0 : index
    %c0_108 = arith.constant 0 : index
    %c4_109 = arith.constant 4 : index
    %c0_110 = arith.constant 0 : index
    %138 = vector.load %arg2[%c0_107, %c0_108, %c4_109, %c0_110] : memref<2x2x6x256xf32, #tpu.memory_space<vmem>>, vector<2x1x1x256xf32>
    %139 = vector.shape_cast %138 : vector<2x1x1x256xf32> to vector<2x256xf32>
    %c0_111 = arith.constant 0 : index
    %c0_112 = arith.constant 0 : index
    %c5_113 = arith.constant 5 : index
    %c0_114 = arith.constant 0 : index
    %140 = vector.load %arg2[%c0_111, %c0_112, %c5_113, %c0_114] : memref<2x2x6x256xf32, #tpu.memory_space<vmem>>, vector<2x1x1x256xf32>
    %141 = vector.shape_cast %140 : vector<2x1x1x256xf32> to vector<2x256xf32>
    %c0_115 = arith.constant 0 : index
    %c0_116 = arith.constant 0 : index
    %142 = memref.load %arg4[%c0_115, %c0_116] : memref<4x7xf32, #tpu.memory_space<smem>>
    %143 = vector.broadcast %142 : f32 to vector<2x256xf32>
    %144 = arith.mulf %131, %143 : vector<2x256xf32>
    %c0_117 = arith.constant 0 : index
    %c1_118 = arith.constant 1 : index
    %145 = memref.load %arg4[%c0_117, %c1_118] : memref<4x7xf32, #tpu.memory_space<smem>>
    %146 = vector.broadcast %145 : f32 to vector<2x256xf32>
    %147 = arith.mulf %133, %146 : vector<2x256xf32>
    %148 = arith.addf %144, %147 : vector<2x256xf32>
    %c0_119 = arith.constant 0 : index
    %c2_120 = arith.constant 2 : index
    %149 = memref.load %arg4[%c0_119, %c2_120] : memref<4x7xf32, #tpu.memory_space<smem>>
    %150 = vector.broadcast %149 : f32 to vector<2x256xf32>
    %151 = arith.mulf %135, %150 : vector<2x256xf32>
    %152 = arith.addf %148, %151 : vector<2x256xf32>
    %c0_121 = arith.constant 0 : index
    %c3_122 = arith.constant 3 : index
    %153 = memref.load %arg4[%c0_121, %c3_122] : memref<4x7xf32, #tpu.memory_space<smem>>
    %154 = vector.broadcast %153 : f32 to vector<2x256xf32>
    %155 = arith.mulf %137, %154 : vector<2x256xf32>
    %156 = arith.addf %152, %155 : vector<2x256xf32>
    %c0_123 = arith.constant 0 : index
    %c4_124 = arith.constant 4 : index
    %157 = memref.load %arg4[%c0_123, %c4_124] : memref<4x7xf32, #tpu.memory_space<smem>>
    %158 = vector.broadcast %157 : f32 to vector<2x256xf32>
    %159 = arith.mulf %139, %158 : vector<2x256xf32>
    %160 = arith.addf %156, %159 : vector<2x256xf32>
    %c0_125 = arith.constant 0 : index
    %c5_126 = arith.constant 5 : index
    %161 = memref.load %arg4[%c0_125, %c5_126] : memref<4x7xf32, #tpu.memory_space<smem>>
    %162 = vector.broadcast %161 : f32 to vector<2x256xf32>
    %163 = arith.mulf %141, %162 : vector<2x256xf32>
    %164 = arith.addf %160, %163 : vector<2x256xf32>
    %c0_127 = arith.constant 0 : index
    %c6_128 = arith.constant 6 : index
    %165 = memref.load %arg4[%c0_127, %c6_128] : memref<4x7xf32, #tpu.memory_space<smem>>
    %166 = vector.broadcast %165 : f32 to vector<2x256xf32>
    %167 = arith.addf %164, %166 : vector<2x256xf32>
    %c0_129 = arith.constant 0 : index
    %c6_130 = arith.constant 6 : index
    %c0_131 = arith.constant 0 : index
    %168 = vector.load %arg5[%c0_129, %c6_130, %c0_131] : memref<2x26x256xf32, #tpu.memory_space<vmem>>, vector<2x1x256xf32>
    %169 = vector.shape_cast %168 : vector<2x1x256xf32> to vector<2x256xf32>
    %170 = vector.shape_cast %167 : vector<2x256xf32> to vector<2x1x256xf32>
    tpu.vector_store %arg5[%c0_129, %c6_130, %c0_131], %170 {strides = array<i32>} : memref<2x26x256xf32, #tpu.memory_space<vmem>>, vector<2x1x256xf32>,
    %c1_132 = arith.constant 1 : index
    %c0_133 = arith.constant 0 : index
    %171 = memref.load %arg4[%c1_132, %c0_133] : memref<4x7xf32, #tpu.memory_space<smem>>
    %172 = vector.broadcast %171 : f32 to vector<2x256xf32>
    %173 = arith.mulf %131, %172 : vector<2x256xf32>
    %c1_134 = arith.constant 1 : index
    %c1_135 = arith.constant 1 : index
    %174 = memref.load %arg4[%c1_134, %c1_135] : memref<4x7xf32, #tpu.memory_space<smem>>
    %175 = vector.broadcast %174 : f32 to vector<2x256xf32>
    %176 = arith.mulf %133, %175 : vector<2x256xf32>
    %177 = arith.addf %173, %176 : vector<2x256xf32>
    %c1_136 = arith.constant 1 : index
    %c2_137 = arith.constant 2 : index
    %178 = memref.load %arg4[%c1_136, %c2_137] : memref<4x7xf32, #tpu.memory_space<smem>>
    %179 = vector.broadcast %178 : f32 to vector<2x256xf32>
    %180 = arith.mulf %135, %179 : vector<2x256xf32>
    %181 = arith.addf %177, %180 : vector<2x256xf32>
    %c1_138 = arith.constant 1 : index
    %c3_139 = arith.constant 3 : index
    %182 = memref.load %arg4[%c1_138, %c3_139] : memref<4x7xf32, #tpu.memory_space<smem>>
    %183 = vector.broadcast %182 : f32 to vector<2x256xf32>
    %184 = arith.mulf %137, %183 : vector<2x256xf32>
    %185 = arith.addf %181, %184 : vector<2x256xf32>
    %c1_140 = arith.constant 1 : index
    %c4_141 = arith.constant 4 : index
    %186 = memref.load %arg4[%c1_140, %c4_141] : memref<4x7xf32, #tpu.memory_space<smem>>
    %187 = vector.broadcast %186 : f32 to vector<2x256xf32>
    %188 = arith.mulf %139, %187 : vector<2x256xf32>
    %189 = arith.addf %185, %188 : vector<2x256xf32>
    %c1_142 = arith.constant 1 : index
    %c5_143 = arith.constant 5 : index
    %190 = memref.load %arg4[%c1_142, %c5_143] : memref<4x7xf32, #tpu.memory_space<smem>>
    %191 = vector.broadcast %190 : f32 to vector<2x256xf32>
    %192 = arith.mulf %141, %191 : vector<2x256xf32>
    %193 = arith.addf %189, %192 : vector<2x256xf32>
    %c1_144 = arith.constant 1 : index
    %c6_145 = arith.constant 6 : index
    %194 = memref.load %arg4[%c1_144, %c6_145] : memref<4x7xf32, #tpu.memory_space<smem>>
    %195 = vector.broadcast %194 : f32 to vector<2x256xf32>
    %196 = arith.addf %193, %195 : vector<2x256xf32>
    %c0_146 = arith.constant 0 : index
    %c7 = arith.constant 7 : index
    %c0_147 = arith.constant 0 : index
    %197 = vector.load %arg5[%c0_146, %c7, %c0_147] : memref<2x26x256xf32, #tpu.memory_space<vmem>>, vector<2x1x256xf32>
    %198 = vector.shape_cast %197 : vector<2x1x256xf32> to vector<2x256xf32>
    %199 = vector.shape_cast %196 : vector<2x256xf32> to vector<2x1x256xf32>
    tpu.vector_store %arg5[%c0_146, %c7, %c0_147], %199 {strides = array<i32>} : memref<2x26x256xf32, #tpu.memory_space<vmem>>, vector<2x1x256xf32>,
    %c2_148 = arith.constant 2 : index
    %c0_149 = arith.constant 0 : index
    %200 = memref.load %arg4[%c2_148, %c0_149] : memref<4x7xf32, #tpu.memory_space<smem>>
    %201 = vector.broadcast %200 : f32 to vector<2x256xf32>
    %202 = arith.mulf %131, %201 : vector<2x256xf32>
    %c2_150 = arith.constant 2 : index
    %c1_151 = arith.constant 1 : index
    %203 = memref.load %arg4[%c2_150, %c1_151] : memref<4x7xf32, #tpu.memory_space<smem>>
    %204 = vector.broadcast %203 : f32 to vector<2x256xf32>
    %205 = arith.mulf %133, %204 : vector<2x256xf32>
    %206 = arith.addf %202, %205 : vector<2x256xf32>
    %c2_152 = arith.constant 2 : index
    %c2_153 = arith.constant 2 : index
    %207 = memref.load %arg4[%c2_152, %c2_153] : memref<4x7xf32, #tpu.memory_space<smem>>
    %208 = vector.broadcast %207 : f32 to vector<2x256xf32>
    %209 = arith.mulf %135, %208 : vector<2x256xf32>
    %210 = arith.addf %206, %209 : vector<2x256xf32>
    %c2_154 = arith.constant 2 : index
    %c3_155 = arith.constant 3 : index
    %211 = memref.load %arg4[%c2_154, %c3_155] : memref<4x7xf32, #tpu.memory_space<smem>>
    %212 = vector.broadcast %211 : f32 to vector<2x256xf32>
    %213 = arith.mulf %137, %212 : vector<2x256xf32>
    %214 = arith.addf %210, %213 : vector<2x256xf32>
    %c2_156 = arith.constant 2 : index
    %c4_157 = arith.constant 4 : index
    %215 = memref.load %arg4[%c2_156, %c4_157] : memref<4x7xf32, #tpu.memory_space<smem>>
    %216 = vector.broadcast %215 : f32 to vector<2x256xf32>
    %217 = arith.mulf %139, %216 : vector<2x256xf32>
    %218 = arith.addf %214, %217 : vector<2x256xf32>
    %c2_158 = arith.constant 2 : index
    %c5_159 = arith.constant 5 : index
    %219 = memref.load %arg4[%c2_158, %c5_159] : memref<4x7xf32, #tpu.memory_space<smem>>
    %220 = vector.broadcast %219 : f32 to vector<2x256xf32>
    %221 = arith.mulf %141, %220 : vector<2x256xf32>
    %222 = arith.addf %218, %221 : vector<2x256xf32>
    %c2_160 = arith.constant 2 : index
    %c6_161 = arith.constant 6 : index
    %223 = memref.load %arg4[%c2_160, %c6_161] : memref<4x7xf32, #tpu.memory_space<smem>>
    %224 = vector.broadcast %223 : f32 to vector<2x256xf32>
    %225 = arith.addf %222, %224 : vector<2x256xf32>
    %c0_162 = arith.constant 0 : index
    %c8 = arith.constant 8 : index
    %c0_163 = arith.constant 0 : index
    %226 = vector.load %arg5[%c0_162, %c8, %c0_163] : memref<2x26x256xf32, #tpu.memory_space<vmem>>, vector<2x1x256xf32>
    %227 = vector.shape_cast %226 : vector<2x1x256xf32> to vector<2x256xf32>
    %228 = vector.shape_cast %225 : vector<2x256xf32> to vector<2x1x256xf32>
    tpu.vector_store %arg5[%c0_162, %c8, %c0_163], %228 {strides = array<i32>} : memref<2x26x256xf32, #tpu.memory_space<vmem>>, vector<2x1x256xf32>,
    %c3_164 = arith.constant 3 : index
    %c0_165 = arith.constant 0 : index
    %229 = memref.load %arg4[%c3_164, %c0_165] : memref<4x7xf32, #tpu.memory_space<smem>>
    %230 = vector.broadcast %229 : f32 to vector<2x256xf32>
    %231 = arith.mulf %131, %230 : vector<2x256xf32>
    %c3_166 = arith.constant 3 : index
    %c1_167 = arith.constant 1 : index
    %232 = memref.load %arg4[%c3_166, %c1_167] : memref<4x7xf32, #tpu.memory_space<smem>>
    %233 = vector.broadcast %232 : f32 to vector<2x256xf32>
    %234 = arith.mulf %133, %233 : vector<2x256xf32>
    %235 = arith.addf %231, %234 : vector<2x256xf32>
    %c3_168 = arith.constant 3 : index
    %c2_169 = arith.constant 2 : index
    %236 = memref.load %arg4[%c3_168, %c2_169] : memref<4x7xf32, #tpu.memory_space<smem>>
    %237 = vector.broadcast %236 : f32 to vector<2x256xf32>
    %238 = arith.mulf %135, %237 : vector<2x256xf32>
    %239 = arith.addf %235, %238 : vector<2x256xf32>
    %c3_170 = arith.constant 3 : index
    %c3_171 = arith.constant 3 : index
    %240 = memref.load %arg4[%c3_170, %c3_171] : memref<4x7xf32, #tpu.memory_space<smem>>
    %241 = vector.broadcast %240 : f32 to vector<2x256xf32>
    %242 = arith.mulf %137, %241 : vector<2x256xf32>
    %243 = arith.addf %239, %242 : vector<2x256xf32>
    %c3_172 = arith.constant 3 : index
    %c4_173 = arith.constant 4 : index
    %244 = memref.load %arg4[%c3_172, %c4_173] : memref<4x7xf32, #tpu.memory_space<smem>>
    %245 = vector.broadcast %244 : f32 to vector<2x256xf32>
    %246 = arith.mulf %139, %245 : vector<2x256xf32>
    %247 = arith.addf %243, %246 : vector<2x256xf32>
    %c3_174 = arith.constant 3 : index
    %c5_175 = arith.constant 5 : index
    %248 = memref.load %arg4[%c3_174, %c5_175] : memref<4x7xf32, #tpu.memory_space<smem>>
    %249 = vector.broadcast %248 : f32 to vector<2x256xf32>
    %250 = arith.mulf %141, %249 : vector<2x256xf32>
    %251 = arith.addf %247, %250 : vector<2x256xf32>
    %c3_176 = arith.constant 3 : index
    %c6_177 = arith.constant 6 : index
    %252 = memref.load %arg4[%c3_176, %c6_177] : memref<4x7xf32, #tpu.memory_space<smem>>
    %253 = vector.broadcast %252 : f32 to vector<2x256xf32>
    %254 = arith.addf %251, %253 : vector<2x256xf32>
    %c0_178 = arith.constant 0 : index
    %c9 = arith.constant 9 : index
    %c0_179 = arith.constant 0 : index
    %255 = vector.load %arg5[%c0_178, %c9, %c0_179] : memref<2x26x256xf32, #tpu.memory_space<vmem>>, vector<2x1x256xf32>
    %256 = vector.shape_cast %255 : vector<2x1x256xf32> to vector<2x256xf32>
    %257 = vector.shape_cast %254 : vector<2x256xf32> to vector<2x1x256xf32>
    tpu.vector_store %arg5[%c0_178, %c9, %c0_179], %257 {strides = array<i32>} : memref<2x26x256xf32, #tpu.memory_space<vmem>>, vector<2x1x256xf32>,
    %c2_i32 = arith.constant 2 : i32
    %258 = arith.muli %arg0, %c2_i32 : i32
    %259 = arith.index_cast %258 : i32 to index
    %c0_180 = arith.constant 0 : index
    %c0_181 = arith.constant 0 : index
    %260 = vector.load %arg3[%259, %c0_180, %c0_181] : memref<2x16x1xf32, #tpu.memory_space<vmem>>, vector<2x16x1xf32>
    %261 = vector.shape_cast %260 : vector<2x16x1xf32> to vector<2x16x1xf32>
    %262 = vector.broadcast %261 : vector<2x16x1xf32> to vector<2x16x256xf32>
    %c0_182 = arith.constant 0 : index
    %c10 = arith.constant 10 : index
    %c0_183 = arith.constant 0 : index
    %263 = vector.load %arg5[%c0_182, %c10, %c0_183] : memref<2x26x256xf32, #tpu.memory_space<vmem>>, vector<2x16x256xf32>
    tpu.vector_store %arg5[%c0_182, %c10, %c0_183], %262 {strides = array<i32>} : memref<2x26x256xf32, #tpu.memory_space<vmem>>, vector<2x16x256xf32>,
    return
  }
  func.func @transform_0(%arg0: i32) -> (i32, i32, i32) {
    %c0_i32 = arith.constant 0 : i32
    %c0_i32_0 = arith.constant 0 : i32
    %c0_i32_1 = arith.constant 0 : i32
    return %arg0, %c0_i32, %c0_i32_0 : i32, i32, i32
  }
  func.func @transform_1(%arg0: i32) -> (i32, i32, i32, i32) {
    %c0_i32 = arith.constant 0 : i32
    %c0_i32_0 = arith.constant 0 : i32
    %c0_i32_1 = arith.constant 0 : i32
    %c0_i32_2 = arith.constant 0 : i32
    return %arg0, %c0_i32, %c0_i32_0, %c0_i32_1 : i32, i32, i32, i32
  }
  func.func @transform_2(%arg0: i32) -> (i32, i32, i32) {
    %c0_i32 = arith.constant 0 : i32
    %c0_i32_0 = arith.constant 0 : i32
    %c0_i32_1 = arith.constant 0 : i32
    %c0_i32_2 = arith.constant 0 : i32
    return %c0_i32, %c0_i32_0, %c0_i32_1 : i32, i32, i32
  }
  func.func @transform_3(%arg0: i32) -> (i32, i32) {
    %c0_i32 = arith.constant 0 : i32
    %c0_i32_0 = arith.constant 0 : i32
    %c0_i32_1 = arith.constant 0 : i32
    return %c0_i32, %c0_i32_0 : i32, i32
  }
  func.func @transform_4(%arg0: i32) -> (i32, i32, i32) {
    %c0_i32 = arith.constant 0 : i32
    %c0_i32_0 = arith.constant 0 : i32
    %c0_i32_1 = arith.constant 0 : i32
    return %arg0, %c0_i32, %c0_i32_0 : i32, i32, i32
  }
}

</mosaic_0001>

<llo_original>
// kernel: tpu_custom_call.1
$region0: #{tpu_custom_call.1}
  #allocation0 [shape = 'u32[]', space=smem, size = 0x4, offset = 0x4, fixed_abs, tag = 'smem constant byte address 0x4 - core index']
  #allocation1 [shape = 'u32[144,128]{1,0:T(1,128)}', space=vmem, size = 0x12000, scoped, tag = 'internal scratch']
  %s0 = inlined_call_operand.vmem [shape: f32[2,2,256], index: 0, kind: input, shape index: {}]
  %s1 = inlined_call_operand.vmem [shape: f32[2,2,6,256], index: 1, kind: input, shape index: {}]
  %s2 = inlined_call_operand.vmem [shape: f32[2,16,1], index: 2, kind: input, shape index: {}]
  %s3 = inlined_call_operand.vmem [shape: f32[4,7], index: 3, kind: input, shape index: {}]
  %s4 = inlined_call_operand.vmem [shape: f32[2,26,256], index: 4, kind: output, shape index: {}]
  %s5 = sld [smem:[#allocation0]]
  $region30: #{tpu_custom_call.1} parent=0
    _
  %s7 = ssub.s32 1, %s5
  %s8 = scalar_select 0, %s7, %s5
  $region1: #{tpu_custom_call.1} parent=0
    #allocation2 [shape = 'u8[2048]{0}', space=smem, size = 0x800, scoped, tag = 'input window, operand 3, single buffered']
    #allocation3 [shape = 's32[1]{0}', space=sflag, size = 0x4, scoped, tag = 'scoped memory for tpu_custom_call.1']
    %9 = vsyncpa [#allocation3], 0
    // Predicated region
    $region2: #{tpu_custom_call.1} parent=1 // pred_check
      _
    $region3: #{tpu_custom_call.1} parent=1 // pred_check_branch
      %11 = sbr.rel (0) target = $region5
    $region4: #{tpu_custom_call.1} parent=1 // pred_region
      _
    $region5: #{tpu_custom_call.1} parent=1 // pred_fallthru
      _
    // Predicated region
    $region6: #{tpu_custom_call.1} parent=1 // pred_check
      _
    $region7: #{tpu_custom_call.1} parent=1 // pred_check_branch
      %13 = sbr.rel (0) target = $region9
    $region8: #{tpu_custom_call.1} parent=1 // pred_region
      _
    $region9: #{tpu_custom_call.1} parent=1 // pred_fallthru
      _
    // Predicated region
    $region10: #{tpu_custom_call.1} parent=1 // pred_check
      _
    $region11: #{tpu_custom_call.1} parent=1 // pred_check_branch
      %15 = sbr.rel (0) target = $region13
    $region12: #{tpu_custom_call.1} parent=1 // pred_region
      _
    $region13: #{tpu_custom_call.1} parent=1 // pred_fallthru
      _
    // Predicated region
    $region14: #{tpu_custom_call.1} parent=1 // pred_check
      _
    $region15: #{tpu_custom_call.1} parent=1 // pred_check_branch
      %17 = sbr.rel (0) target = $region17
    $region16: #{tpu_custom_call.1} parent=1 // pred_region
      %s19 = ssub.s32 64, 64
      %20 = vsyncadd [#allocation3], %s19
      %s22 = sshll.u32 %s3, 4
      %s23 = int_to_ptr.vmem [resolvable:$true] %s22
      %25 = dma.vmem_to_smem %s23, 64, [#allocation2], [#allocation3]
    $region17: #{tpu_custom_call.1} parent=1 // pred_fallthru
      _
    // Predicated region
    $region18: #{tpu_custom_call.1} parent=1 // pred_check
      _
    $region19: #{tpu_custom_call.1} parent=1 // pred_check_branch
      %27 = sbr.rel (0) target = $region21
    $region20: #{tpu_custom_call.1} parent=1 // pred_region
      %28 = dma.done [#allocation3], 64
    $region21: #{tpu_custom_call.1} parent=1 // pred_fallthru
      _
    %29 = sfence
    %v30 = vld [vmem:[%s0] sm:$0xf]
    %v31 = vld [vmem:[%s0 + $0x4] sm:$0xf]
    %v35 = vunpack.c.l.s4 1983009808
    %v36 = vunpack.c.0.s8 %v35
    %v37 = vlaneseq
    %v38 = vshrl.u32 %v37, 7
    %v39 = vsub.s32 %v36, %v38
    %v40 = vrot.slane %v30, %v39
    %v41 = vcombine.high %v40, %v40
    %v43 = vunpack.c.l.s4 1983009808
    %v44 = vunpack.c.0.s8 %v43
    %v45 = vlaneseq
    %v46 = vshrl.u32 %v45, 7
    %v47 = vsub.s32 %v44, %v46
    %v48 = vrot.slane %v31, %v47
    %v49 = vcombine.high %v48, %v48
    %54 = vst [vmem:[%s4] sm:$0x3] %v40
    %55 = vst [vmem:[%s4 + $0x8] sm:$0x3] %v41
    %56 = vst [vmem:[%s4 + $0x40] sm:$0x3] %v48
    %57 = vst [vmem:[%s4 + $0x48] sm:$0x3] %v49
    %s58 = scalar_lea.vmem %s1, 16
    %v59 = vld [vmem:[%s58] ss:$8 sm:$0x3]
    %s60 = scalar_lea.vmem %s58, 32
    %v61 = vld [vmem:[%s60] ss:$8 sm:$0x3]
    %s62 = scalar_lea.vmem %s58, 1
    %v63 = vld [vmem:[%s62] ss:$8 sm:$0x3]
    %s64 = scalar_lea.vmem %s58, 33
    %v65 = vld [vmem:[%s64] ss:$8 sm:$0x3]
    %s66 = scalar_lea.vmem %s58, 2
    %v67 = vld [vmem:[%s66] ss:$8 sm:$0x3]
    %s68 = scalar_lea.vmem %s58, 34
    %v69 = vld [vmem:[%s68] ss:$8 sm:$0x3]
    %s70 = scalar_lea.vmem %s58, 3
    %v71 = vld [vmem:[%s70] ss:$8 sm:$0x3]
    %s72 = scalar_lea.vmem %s58, 35
    %v73 = vld [vmem:[%s72] ss:$8 sm:$0x3]
    %s74 = scalar_lea.vmem %s58, 4
    %v75 = vld [vmem:[%s74] ss:$8 sm:$0x3]
    %s76 = scalar_lea.vmem %s58, 36
    %v77 = vld [vmem:[%s76] ss:$8 sm:$0x3]
    %s78 = scalar_lea.vmem %s58, 5
    %v79 = vld [vmem:[%s78] ss:$8 sm:$0x3]
    %s80 = scalar_lea.vmem %s58, 37
    %v81 = vld [vmem:[%s80] ss:$8 sm:$0x3]
    %s82 = sld [smem:[#allocation2]]
    %v83 = vstv %s82
    %v84 = vmul.f32 %v59, %v83
    %v85 = vmul.f32 %v61, %v83
    %s86 = sld [smem:[#allocation2 + $0x1]]
    %v87 = vstv %s86
    %v88 = vmul.f32 %v63, %v87
    %v89 = vmul.f32 %v65, %v87
    %v90 = vadd.f32 %v84, %v88
    %v91 = vadd.f32 %v85, %v89
    %s92 = sld [smem:[#allocation2 + $0x2]]
    %v93 = vstv %s92
    %v94 = vmul.f32 %v67, %v93
    %v95 = vmul.f32 %v69, %v93
    %v96 = vadd.f32 %v90, %v94
    %v97 = vadd.f32 %v91, %v95
    %s98 = sld [smem:[#allocation2 + $0x3]]
    %v99 = vstv %s98
    %v100 = vmul.f32 %v71, %v99
    %v101 = vmul.f32 %v73, %v99
    %v102 = vadd.f32 %v96, %v100
    %v103 = vadd.f32 %v97, %v101
    %s104 = sld [smem:[#allocation2 + $0x4]]
    %v105 = vstv %s104
    %v106 = vmul.f32 %v75, %v105
    %v107 = vmul.f32 %v77, %v105
    %v108 = vadd.f32 %v102, %v106
    %v109 = vadd.f32 %v103, %v107
    %s110 = sld [smem:[#allocation2 + $0x5]]
    %v111 = vstv %s110
    %v112 = vmul.f32 %v79, %v111
    %v113 = vmul.f32 %v81, %v111
    %v114 = vadd.f32 %v108, %v112
    %v115 = vadd.f32 %v109, %v113
    %s116 = sld [smem:[#allocation2 + $0x6]]
    %v117 = vstv %s116
    %v118 = vadd.f32 %v114, %v117
    %v119 = vadd.f32 %v115, %v117
    %v120 = vlaneseq
    %vm121 = vcmp.ge.s32.totalorder %v120, 0
    %vm122 = vcmp.lt.s32.totalorder %v120, 256
    %vm123 = vmand %vm121, %vm122
    %s124 = scalar_lea.vmem %s4, 2
    %125 = vst.msk [vmem:[%s124] ss:$8 sm:$0x3] %vm123, %v118
    %126 = vst.msk [vmem:[%s124] ss:$8 sm:$0x0] %vm123, %v118
    %s127 = scalar_lea.vmem %s4, 66
    %128 = vst.msk [vmem:[%s127] ss:$8 sm:$0x3] %vm123, %v119
    %129 = vst.msk [vmem:[%s127] ss:$8 sm:$0x0] %vm123, %v119
    %s130 = sld [smem:[#allocation2 + $0x80]]
    %v131 = vstv %s130
    %v132 = vmul.f32 %v59, %v131
    %v133 = vmul.f32 %v61, %v131
    %s134 = sld [smem:[#allocation2 + $0x81]]
    %v135 = vstv %s134
    %v136 = vmul.f32 %v63, %v135
    %v137 = vmul.f32 %v65, %v135
    %v138 = vadd.f32 %v132, %v136
    %v139 = vadd.f32 %v133, %v137
    %s140 = sld [smem:[#allocation2 + $0x82]]
    %v141 = vstv %s140
    %v142 = vmul.f32 %v67, %v141
    %v143 = vmul.f32 %v69, %v141
    %v144 = vadd.f32 %v138, %v142
    %v145 = vadd.f32 %v139, %v143
    %s146 = sld [smem:[#allocation2 + $0x83]]
    %v147 = vstv %s146
    %v148 = vmul.f32 %v71, %v147
    %v149 = vmul.f32 %v73, %v147
    %v150 = vadd.f32 %v144, %v148
    %v151 = vadd.f32 %v145, %v149
    %s152 = sld [smem:[#allocation2 + $0x84]]
    %v153 = vstv %s152
    %v154 = vmul.f32 %v75, %v153
    %v155 = vmul.f32 %v77, %v153
    %v156 = vadd.f32 %v150, %v154
    %v157 = vadd.f32 %v151, %v155
    %s158 = sld [smem:[#allocation2 + $0x85]]
    %v159 = vstv %s158
    %v160 = vmul.f32 %v79, %v159
    %v161 = vmul.f32 %v81, %v159
    %v162 = vadd.f32 %v156, %v160
    %v163 = vadd.f32 %v157, %v161
    %s164 = sld [smem:[#allocation2 + $0x86]]
    %v165 = vstv %s164
    %v166 = vadd.f32 %v162, %v165
    %v167 = vadd.f32 %v163, %v165
    %s168 = scalar_lea.vmem %s4, 3
    %169 = vst.msk [vmem:[%s168] ss:$8 sm:$0x3] %vm123, %v166
    %170 = vst.msk [vmem:[%s168] ss:$8 sm:$0x0] %vm123, %v166
    %s171 = scalar_lea.vmem %s4, 67
    %172 = vst.msk [vmem:[%s171] ss:$8 sm:$0x3] %vm123, %v167
    %173 = vst.msk [vmem:[%s171] ss:$8 sm:$0x0] %vm123, %v167
    %s174 = sld [smem:[#allocation2 + $0x100]]
    %v175 = vstv %s174
    %v176 = vmul.f32 %v59, %v175
    %v177 = vmul.f32 %v61, %v175
    %s178 = sld [smem:[#allocation2 + $0x101]]
    %v179 = vstv %s178
    %v180 = vmul.f32 %v63, %v179
    %v181 = vmul.f32 %v65, %v179
    %v182 = vadd.f32 %v176, %v180
    %v183 = vadd.f32 %v177, %v181
    %s184 = sld [smem:[#allocation2 + $0x102]]
    %v185 = vstv %s184
    %v186 = vmul.f32 %v67, %v185
    %v187 = vmul.f32 %v69, %v185
    %v188 = vadd.f32 %v182, %v186
    %v189 = vadd.f32 %v183, %v187
    %s190 = sld [smem:[#allocation2 + $0x103]]
    %v191 = vstv %s190
    %v192 = vmul.f32 %v71, %v191
    %v193 = vmul.f32 %v73, %v191
    %v194 = vadd.f32 %v188, %v192
    %v195 = vadd.f32 %v189, %v193
    %s196 = sld [smem:[#allocation2 + $0x104]]
    %v197 = vstv %s196
    %v198 = vmul.f32 %v75, %v197
    %v199 = vmul.f32 %v77, %v197
    %v200 = vadd.f32 %v194, %v198
    %v201 = vadd.f32 %v195, %v199
    %s202 = sld [smem:[#allocation2 + $0x105]]
    %v203 = vstv %s202
    %v204 = vmul.f32 %v79, %v203
    %v205 = vmul.f32 %v81, %v203
    %v206 = vadd.f32 %v200, %v204
    %v207 = vadd.f32 %v201, %v205
    %s208 = sld [smem:[#allocation2 + $0x106]]
    %v209 = vstv %s208
    %v210 = vadd.f32 %v206, %v209
    %v211 = vadd.f32 %v207, %v209
    %s212 = scalar_lea.vmem %s4, 4
    %213 = vst.msk [vmem:[%s212] ss:$8 sm:$0x3] %vm123, %v210
    %214 = vst.msk [vmem:[%s212] ss:$8 sm:$0x0] %vm123, %v210
    %s215 = scalar_lea.vmem %s4, 68
    %216 = vst.msk [vmem:[%s215] ss:$8 sm:$0x3] %vm123, %v211
    %217 = vst.msk [vmem:[%s215] ss:$8 sm:$0x0] %vm123, %v211
    %s218 = sld [smem:[#allocation2 + $0x180]]
    %v219 = vstv %s218
    %v220 = vmul.f32 %v59, %v219
    %v221 = vmul.f32 %v61, %v219
    %s222 = sld [smem:[#allocation2 + $0x181]]
    %v223 = vstv %s222
    %v224 = vmul.f32 %v63, %v223
    %v225 = vmul.f32 %v65, %v223
    %v226 = vadd.f32 %v220, %v224
    %v227 = vadd.f32 %v221, %v225
    %s228 = sld [smem:[#allocation2 + $0x182]]
    %v229 = vstv %s228
    %v230 = vmul.f32 %v67, %v229
    %v231 = vmul.f32 %v69, %v229
    %v232 = vadd.f32 %v226, %v230
    %v233 = vadd.f32 %v227, %v231
    %s234 = sld [smem:[#allocation2 + $0x183]]
    %v235 = vstv %s234
    %v236 = vmul.f32 %v71, %v235
    %v237 = vmul.f32 %v73, %v235
    %v238 = vadd.f32 %v232, %v236
    %v239 = vadd.f32 %v233, %v237
    %s240 = sld [smem:[#allocation2 + $0x184]]
    %v241 = vstv %s240
    %v242 = vmul.f32 %v75, %v241
    %v243 = vmul.f32 %v77, %v241
    %v244 = vadd.f32 %v238, %v242
    %v245 = vadd.f32 %v239, %v243
    %s246 = sld [smem:[#allocation2 + $0x185]]
    %v247 = vstv %s246
    %v248 = vmul.f32 %v79, %v247
    %v249 = vmul.f32 %v81, %v247
    %v250 = vadd.f32 %v244, %v248
    %v251 = vadd.f32 %v245, %v249
    %s252 = sld [smem:[#allocation2 + $0x186]]
    %v253 = vstv %s252
    %v254 = vadd.f32 %v250, %v253
    %v255 = vadd.f32 %v251, %v253
    %s256 = scalar_lea.vmem %s4, 5
    %257 = vst.msk [vmem:[%s256] ss:$8 sm:$0x3] %vm123, %v254
    %258 = vst.msk [vmem:[%s256] ss:$8 sm:$0x0] %vm123, %v254
    %s259 = scalar_lea.vmem %s4, 69
    %260 = vst.msk [vmem:[%s259] ss:$8 sm:$0x3] %vm123, %v255
    %261 = vst.msk [vmem:[%s259] ss:$8 sm:$0x0] %vm123, %v255
    %v262 = vld [vmem:[%s1] ss:$8 sm:$0x3]
    %s263 = scalar_lea.vmem %s1, 32
    %v264 = vld [vmem:[%s263] ss:$8 sm:$0x3]
    %s265 = scalar_lea.vmem %s1, 1
    %v266 = vld [vmem:[%s265] ss:$8 sm:$0x3]
    %s267 = scalar_lea.vmem %s1, 33
    %v268 = vld [vmem:[%s267] ss:$8 sm:$0x3]
    %s269 = scalar_lea.vmem %s1, 2
    %v270 = vld [vmem:[%s269] ss:$8 sm:$0x3]
    %s271 = scalar_lea.vmem %s1, 34
    %v272 = vld [vmem:[%s271] ss:$8 sm:$0x3]
    %s273 = scalar_lea.vmem %s1, 3
    %v274 = vld [vmem:[%s273] ss:$8 sm:$0x3]
    %s275 = scalar_lea.vmem %s1, 35
    %v276 = vld [vmem:[%s275] ss:$8 sm:$0x3]
    %s277 = scalar_lea.vmem %s1, 4
    %v278 = vld [vmem:[%s277] ss:$8 sm:$0x3]
    %s279 = scalar_lea.vmem %s1, 36
    %v280 = vld [vmem:[%s279] ss:$8 sm:$0x3]
    %s281 = scalar_lea.vmem %s1, 5
    %v282 = vld [vmem:[%s281] ss:$8 sm:$0x3]
    %s283 = scalar_lea.vmem %s1, 37
    %v284 = vld [vmem:[%s283] ss:$8 sm:$0x3]
    %s285 = sld [smem:[#allocation2]]
    %v286 = vstv %s285
    %v287 = vmul.f32 %v262, %v286
    %v288 = vmul.f32 %v264, %v286
    %s289 = sld [smem:[#allocation2 + $0x1]]
    %v290 = vstv %s289
    %v291 = vmul.f32 %v266, %v290
    %v292 = vmul.f32 %v268, %v290
    %v293 = vadd.f32 %v287, %v291
    %v294 = vadd.f32 %v288, %v292
    %s295 = sld [smem:[#allocation2 + $0x2]]
    %v296 = vstv %s295
    %v297 = vmul.f32 %v270, %v296
    %v298 = vmul.f32 %v272, %v296
    %v299 = vadd.f32 %v293, %v297
    %v300 = vadd.f32 %v294, %v298
    %s301 = sld [smem:[#allocation2 + $0x3]]
    %v302 = vstv %s301
    %v303 = vmul.f32 %v274, %v302
    %v304 = vmul.f32 %v276, %v302
    %v305 = vadd.f32 %v299, %v303
    %v306 = vadd.f32 %v300, %v304
    %s307 = sld [smem:[#allocation2 + $0x4]]
    %v308 = vstv %s307
    %v309 = vmul.f32 %v278, %v308
    %v310 = vmul.f32 %v280, %v308
    %v311 = vadd.f32 %v305, %v309
    %v312 = vadd.f32 %v306, %v310
    %s313 = sld [smem:[#allocation2 + $0x5]]
    %v314 = vstv %s313
    %v315 = vmul.f32 %v282, %v314
    %v316 = vmul.f32 %v284, %v314
    %v317 = vadd.f32 %v311, %v315
    %v318 = vadd.f32 %v312, %v316
    %s319 = sld [smem:[#allocation2 + $0x6]]
    %v320 = vstv %s319
    %v321 = vadd.f32 %v317, %v320
    %v322 = vadd.f32 %v318, %v320
    %s323 = scalar_lea.vmem %s4, 6
    %324 = vst.msk [vmem:[%s323] ss:$8 sm:$0x3] %vm123, %v321
    %325 = vst.msk [vmem:[%s323] ss:$8 sm:$0x0] %vm123, %v321
    %s326 = scalar_lea.vmem %s4, 70
    %327 = vst.msk [vmem:[%s326] ss:$8 sm:$0x3] %vm123, %v322
    %328 = vst.msk [vmem:[%s326] ss:$8 sm:$0x0] %vm123, %v322
    %s329 = sld [smem:[#allocation2 + $0x80]]
    %v330 = vstv %s329
    %v331 = vmul.f32 %v262, %v330
    %v332 = vmul.f32 %v264, %v330
    %s333 = sld [smem:[#allocation2 + $0x81]]
    %v334 = vstv %s333
    %v335 = vmul.f32 %v266, %v334
    %v336 = vmul.f32 %v268, %v334
    %v337 = vadd.f32 %v331, %v335
    %v338 = vadd.f32 %v332, %v336
    %s339 = sld [smem:[#allocation2 + $0x82]]
    %v340 = vstv %s339
    %v341 = vmul.f32 %v270, %v340
    %v342 = vmul.f32 %v272, %v340
    %v343 = vadd.f32 %v337, %v341
    %v344 = vadd.f32 %v338, %v342
    %s345 = sld [smem:[#allocation2 + $0x83]]
    %v346 = vstv %s345
    %v347 = vmul.f32 %v274, %v346
    %v348 = vmul.f32 %v276, %v346
    %v349 = vadd.f32 %v343, %v347
    %v350 = vadd.f32 %v344, %v348
    %s351 = sld [smem:[#allocation2 + $0x84]]
    %v352 = vstv %s351
    %v353 = vmul.f32 %v278, %v352
    %v354 = vmul.f32 %v280, %v352
    %v355 = vadd.f32 %v349, %v353
    %v356 = vadd.f32 %v350, %v354
    %s357 = sld [smem:[#allocation2 + $0x85]]
    %v358 = vstv %s357
    %v359 = vmul.f32 %v282, %v358
    %v360 = vmul.f32 %v284, %v358
    %v361 = vadd.f32 %v355, %v359
    %v362 = vadd.f32 %v356, %v360
    %s363 = sld [smem:[#allocation2 + $0x86]]
    %v364 = vstv %s363
    %v365 = vadd.f32 %v361, %v364
    %v366 = vadd.f32 %v362, %v364
    %s367 = scalar_lea.vmem %s4, 7
    %368 = vst.msk [vmem:[%s367] ss:$8 sm:$0x3] %vm123, %v365
    %369 = vst.msk [vmem:[%s367] ss:$8 sm:$0x0] %vm123, %v365
    %s370 = scalar_lea.vmem %s4, 71
    %371 = vst.msk [vmem:[%s370] ss:$8 sm:$0x3] %vm123, %v366
    %372 = vst.msk [vmem:[%s370] ss:$8 sm:$0x0] %vm123, %v366
    %s373 = sld [smem:[#allocation2 + $0x100]]
    %v374 = vstv %s373
    %v375 = vmul.f32 %v262, %v374
    %v376 = vmul.f32 %v264, %v374
    %s377 = sld [smem:[#allocation2 + $0x101]]
    %v378 = vstv %s377
    %v379 = vmul.f32 %v266, %v378
    %v380 = vmul.f32 %v268, %v378
    %v381 = vadd.f32 %v375, %v379
    %v382 = vadd.f32 %v376, %v380
    %s383 = sld [smem:[#allocation2 + $0x102]]
    %v384 = vstv %s383
    %v385 = vmul.f32 %v270, %v384
    %v386 = vmul.f32 %v272, %v384
    %v387 = vadd.f32 %v381, %v385
    %v388 = vadd.f32 %v382, %v386
    %s389 = sld [smem:[#allocation2 + $0x103]]
    %v390 = vstv %s389
    %v391 = vmul.f32 %v274, %v390
    %v392 = vmul.f32 %v276, %v390
    %v393 = vadd.f32 %v387, %v391
    %v394 = vadd.f32 %v388, %v392
    %s395 = sld [smem:[#allocation2 + $0x104]]
    %v396 = vstv %s395
    %v397 = vmul.f32 %v278, %v396
    %v398 = vmul.f32 %v280, %v396
    %v399 = vadd.f32 %v393, %v397
    %v400 = vadd.f32 %v394, %v398
    %s401 = sld [smem:[#allocation2 + $0x105]]
    %v402 = vstv %s401
    %v403 = vmul.f32 %v282, %v402
    %v404 = vmul.f32 %v284, %v402
    %v405 = vadd.f32 %v399, %v403
    %v406 = vadd.f32 %v400, %v404
    %s407 = sld [smem:[#allocation2 + $0x106]]
    %v408 = vstv %s407
    %v409 = vadd.f32 %v405, %v408
    %v410 = vadd.f32 %v406, %v408
    %s411 = scalar_lea.vmem %s4, 16
    %412 = vst.msk [vmem:[%s411] ss:$8 sm:$0x3] %vm123, %v409
    %413 = vst.msk [vmem:[%s411] ss:$8 sm:$0x0] %vm123, %v409
    %s414 = scalar_lea.vmem %s4, 80
    %415 = vst.msk [vmem:[%s414] ss:$8 sm:$0x3] %vm123, %v410
    %416 = vst.msk [vmem:[%s414] ss:$8 sm:$0x0] %vm123, %v410
    %s417 = sld [smem:[#allocation2 + $0x180]]
    %v418 = vstv %s417
    %v419 = vmul.f32 %v262, %v418
    %v420 = vmul.f32 %v264, %v418
    %s421 = sld [smem:[#allocation2 + $0x181]]
    %v422 = vstv %s421
    %v423 = vmul.f32 %v266, %v422
    %v424 = vmul.f32 %v268, %v422
    %v425 = vadd.f32 %v419, %v423
    %v426 = vadd.f32 %v420, %v424
    %s427 = sld [smem:[#allocation2 + $0x182]]
    %v428 = vstv %s427
    %v429 = vmul.f32 %v270, %v428
    %v430 = vmul.f32 %v272, %v428
    %v431 = vadd.f32 %v425, %v429
    %v432 = vadd.f32 %v426, %v430
    %s433 = sld [smem:[#allocation2 + $0x183]]
    %v434 = vstv %s433
    %v435 = vmul.f32 %v274, %v434
    %v436 = vmul.f32 %v276, %v434
    %v437 = vadd.f32 %v431, %v435
    %v438 = vadd.f32 %v432, %v436
    %s439 = sld [smem:[#allocation2 + $0x184]]
    %v440 = vstv %s439
    %v441 = vmul.f32 %v278, %v440
    %v442 = vmul.f32 %v280, %v440
    %v443 = vadd.f32 %v437, %v441
    %v444 = vadd.f32 %v438, %v442
    %s445 = sld [smem:[#allocation2 + $0x185]]
    %v446 = vstv %s445
    %v447 = vmul.f32 %v282, %v446
    %v448 = vmul.f32 %v284, %v446
    %v449 = vadd.f32 %v443, %v447
    %v450 = vadd.f32 %v444, %v448
    %s451 = sld [smem:[#allocation2 + $0x186]]
    %v452 = vstv %s451
    %v453 = vadd.f32 %v449, %v452
    %v454 = vadd.f32 %v450, %v452
    %s455 = scalar_lea.vmem %s4, 17
    %456 = vst.msk [vmem:[%s455] ss:$8 sm:$0x3] %vm123, %v453
    %457 = vst.msk [vmem:[%s455] ss:$8 sm:$0x0] %vm123, %v453
    %s458 = scalar_lea.vmem %s4, 81
    %459 = vst.msk [vmem:[%s458] ss:$8 sm:$0x3] %vm123, %v454
    %460 = vst.msk [vmem:[%s458] ss:$8 sm:$0x0] %vm123, %v454
    %s461 = smul.u32 0, 2
    %s462 = smul.u32 %s461, 16
    %s463 = scalar_lea.vmem %s2, %s462
    %v464 = vld [vmem:[%s463] sm:$0xff]
    %v465 = vld [vmem:[%s463 + $0x8] sm:$0xff]
    %v466 = vld [vmem:[%s463 + $0x10] sm:$0xff]
    %v467 = vld [vmem:[%s463 + $0x18] sm:$0xff]
    %469 = vset.pattern.permute.xlu0 0
    %470 = vperm.xlu0 %469, %v464
    %v471 = vpop.permute.xlu0 %470
    %473 = vset.pattern.permute.xlu0 0
    %474 = vperm.xlu0 %473, %v465
    %v475 = vpop.permute.xlu0 %474
    %477 = vset.pattern.permute.xlu0 0
    %478 = vperm.xlu0 %477, %v466
    %v479 = vpop.permute.xlu0 %478
    %481 = vset.pattern.permute.xlu0 0
    %482 = vperm.xlu0 %481, %v467
    %v483 = vpop.permute.xlu0 %482
    %vm484 = vcmask 1041408
    %v485 = vrot.slane %v471, 6
    %v486 = vrot.slane %v475, 6
    %v487 = vsel %vm484, %v485, %v486
    %v488 = vrot.slane %v479, 6
    %v489 = vrot.slane %v483, 6
    %v490 = vsel %vm484, %v488, %v489
    %497 = vst [vmem:[%s4 + $0x10] sm:$0xfc] %v485
    %498 = vst [vmem:[%s4 + $0x18] sm:$0xfc] %v485
    %499 = vst [vmem:[%s4 + $0x20] sm:$0xff] %v487
    %500 = vst [vmem:[%s4 + $0x28] sm:$0xff] %v487
    %501 = vst [vmem:[%s4 + $0x30] sm:$0x3] %v486
    %502 = vst [vmem:[%s4 + $0x38] sm:$0x3] %v486
    %503 = vst [vmem:[%s4 + $0x50] sm:$0xfc] %v488
    %504 = vst [vmem:[%s4 + $0x58] sm:$0xfc] %v488
    %505 = vst [vmem:[%s4 + $0x60] sm:$0xff] %v490
    %506 = vst [vmem:[%s4 + $0x68] sm:$0xff] %v490
    %507 = vst [vmem:[%s4 + $0x70] sm:$0x3] %v489
    %508 = vst [vmem:[%s4 + $0x78] sm:$0x3] %v489
    // Predicated region
    $region22: #{tpu_custom_call.1} parent=1 // pred_check
      _
    $region23: #{tpu_custom_call.1} parent=1 // pred_check_branch
      %510 = sbr.rel (0) target = $region25
    $region24: #{tpu_custom_call.1} parent=1 // pred_region
      _
    $region25: #{tpu_custom_call.1} parent=1 // pred_fallthru
      _
    // Predicated region
    $region26: #{tpu_custom_call.1} parent=1 // pred_check
      _
    $region27: #{tpu_custom_call.1} parent=1 // pred_check_branch
      %512 = sbr.rel (0) target = $region29
    $region28: #{tpu_custom_call.1} parent=1 // pred_region
      _
    $region29: #{tpu_custom_call.1} parent=1 // pred_fallthru
      _
    %513 = vsyncpa [#allocation3], 1

</llo_original>
